<compile_context>
chip_gen: v5e
topology: v5e:2x2
jax: 0.10.0
libtpu: 0.0.40
codegen_flags: <defaults>
</compile_context>

<pallas_src>
import jax
import jax.numpy as jnp
from jax import lax
from jax.experimental import pallas as pl
from jax.experimental.pallas import tpu as pltpu

BN_EPS = 1e-5
_LANE = 128
_MXU_MIN_CIN = 16  # below this, a K-deep MXU pass is mostly wasted -> use VPU FMAs


def _channel_matmul(w, x):
    """(Cout, Cin) @ (Cin, T) -> (Cout, T) with f32 accumulation."""
    cout, cin = w.shape
    if cin >= _MXU_MIN_CIN:
        return jnp.dot(w.astype(x.dtype), x, preferred_element_type=jnp.float32)
    # Tiny contraction: unrolled broadcast multiply-adds on the VPU keep the
    # (Cout, T) lane-dense layout and avoid MXU latency/drain.
    z = w[:, 0:1].astype(jnp.float32) * x[0:1, :].astype(jnp.float32)
    for k in range(1, cin):
        z = z + w[:, k:k + 1].astype(jnp.float32) * x[k:k + 1, :].astype(jnp.float32)
    return z


def _stats_kernel(x_ref, w_ref, sumy_ref, sumsq_ref):
    # Pass 1: accumulate per-output-channel sum(y) and sum(y*y), y = W @ x.
    # (conv bias omitted: it cancels under BN mean subtraction.)
    @pl.when((pl.program_id(0) == 0) & (pl.program_id(1) == 0))
    def _init():
        sumy_ref[...] = jnp.zeros_like(sumy_ref)
        sumsq_ref[...] = jnp.zeros_like(sumsq_ref)

    x = x_ref[0]                         # (Cin, T)
    y = _channel_matmul(w_ref[...], x)   # (Cout, T) f32
    sumy_ref[...] += jnp.sum(y, axis=1, keepdims=True)
    sumsq_ref[...] += jnp.sum(y * y, axis=1, keepdims=True)


def _normalize_kernel(x_ref, wf_ref, shift_ref, o_ref):
    # Pass 2: z = (scale*W) @ x + shift, then ELU(alpha=1).
    x = x_ref[0]                                            # (Cin, T)
    z = _channel_matmul(wf_ref[...], x) + shift_ref[...]    # (Cout, T)
    # exp(z)-1 kept (vs expm1) for guaranteed Mosaic lowering; abs error ~1e-8.
    o_ref[0] = jnp.where(z > 0, z, jnp.exp(z) - 1.0).astype(o_ref.dtype)


def _pick_hw_tile(hw, cin, cout, vmem_budget_bytes=4 * 1024 * 1024):
    """Columns per tile (multiple of 128), sized against a small VMEM budget:
    2 buffers x (cin + cout) x T x 4 B  <<  scoped VMEM on all generations."""
    t = vmem_budget_bytes // (2 * (cin + cout) * 4)
    t = max(_LANE, (t // _LANE) * _LANE)
    hw_lane = ((hw + _LANE - 1) // _LANE) * _LANE
    return min(t, hw_lane)


def conv_bn_elu(x_nchw, w_oi, bias, gamma, beta):
    """Forward of PointBoxNet.Conv2d.

    x_nchw: (N, Cin, H, W); w_oi: (Cout, Cin) (from (Cout, Cin, 1, 1)).
    `bias` is accepted for API parity but is mathematically cancelled by the
    training-mode BatchNorm mean subtraction.
    """
    del bias
    N, Cin, H, W = x_nchw.shape
    Cout = w_oi.shape[0]
    HW = H * W
    M = N * HW  # true element count per channel for the batch statistics

    T = _pick_hw_tile(HW, Cin, Cout)
    HW_pad = ((HW + T - 1) // T) * T
    n_t = HW_pad // T

    # NCHW stays; merging H,W is a free reshape (no transpose, no extra HBM pass).
    x3 = x_nchw.reshape(N, Cin, HW).astype(jnp.float32)
    if HW_pad != HW:
        # Zero padding is stats-safe (pads contribute 0 to sum / sum-sq and the
        # divisor uses the true M); padded output columns are sliced off below.
        x3 = jnp.pad(x3, ((0, 0), (0, 0), (0, HW_pad - HW)))

    w2 = w_oi.astype(jnp.float32)  # (Cout, Cin)
    # NOTE: casting x3 (and w2) to bfloat16 here halves HBM traffic on v6e/v7x
    # while keeping f32 accumulation; kept f32 to match the PyTorch module.

    x_spec = pl.BlockSpec((1, Cin, T), lambda n, t: (n, 0, t))
    small = lambda shape: pl.BlockSpec(shape, lambda n, t: (0, 0))

    # ---------------- Pass 1: per-channel sum / sum-of-squares ----------------
    sum_y, sum_ysq = pl.pallas_call(
        _stats_kernel,
        grid=(N, n_t),
        in_specs=[x_spec, small((Cout, Cin))],
        out_specs=(small((Cout, 1)), small((Cout, 1))),
        out_shape=(jax.ShapeDtypeStruct((Cout, 1), jnp.float32),
                   jax.ShapeDtypeStruct((Cout, 1), jnp.float32)),
        compiler_params=pltpu.CompilerParams(
            dimension_semantics=("arbitrary", "arbitrary")),
    )(x3, w2)

    # ------------- Finalize BN fold (tiny per-channel math in JAX) ------------
    mean = sum_y / M                                           # (Cout, 1)
    var = jnp.maximum(sum_ysq / M - mean * mean, 0.0)          # biased variance
    scale = gamma.reshape(Cout, 1).astype(jnp.float32) * lax.rsqrt(var + BN_EPS)
    shift = beta.reshape(Cout, 1).astype(jnp.float32) - scale * mean
    w_fold = scale * w2                                        # (Cout, Cin)

    # ------------- Pass 2: z = W_fold @ x + shift ; ELU  (parallel) -----------
    out3 = pl.pallas_call(
        _normalize_kernel,
        grid=(N, n_t),
        in_specs=[x_spec, small((Cout, Cin)), small((Cout, 1))],
        out_specs=pl.BlockSpec((1, Cout, T), lambda n, t: (n, 0, t)),
        out_shape=jax.ShapeDtypeStruct((N, Cout, HW_pad), jnp.float32),
        compiler_params=pltpu.CompilerParams(
            dimension_semantics=("parallel", "parallel")),
    )(x3, w_fold, shift)

    if HW_pad != HW:
        out3 = out3[:, :, :HW]
    return out3.reshape(N, Cout, H, W)


def _reference(x, w, b, gamma, beta):
    """Pure-JAX reference of Conv2d(1x1) + BatchNorm2d(train) + ELU (NCHW)."""
    hp = lax.Precision.HIGHEST
    y = jnp.einsum("oc,nchw->nohw", w, x, precision=hp) + b[None, :, None, None]
    mean = jnp.mean(y, axis=(0, 2, 3), keepdims=True)
    var = jnp.mean((y - mean) ** 2, axis=(0, 2, 3), keepdims=True)
    z = gamma[None, :, None, None] * (y - mean) * lax.rsqrt(var + BN_EPS) \
        + beta[None, :, None, None]
    return jnp.where(z > 0, z, jnp.exp(z) - 1.0)


if __name__ == "__main__":
    N, Cin, Cout, Hs, Ws = 2, 4, 8, 16, 16

    key = jax.random.PRNGKey(0)
    kx, kw, kb, kg, kbeta = jax.random.split(key, 5)

    x = jax.random.normal(kx, (N, Cin, Hs, Ws), dtype=jnp.float32)
    conv_w = 0.1 * jax.random.normal(kw, (Cout, Cin), dtype=jnp.float32)
    conv_b = 0.05 * jax.random.normal(kb, (Cout,), dtype=jnp.float32)
    bn_gamma = 1.0 + 0.1 * jax.random.normal(kg, (Cout,), dtype=jnp.float32)
    bn_beta = 0.1 * jax.random.normal(kbeta, (Cout,), dtype=jnp.float32)

    out = jax.jit(conv_bn_elu)(x, conv_w, conv_b, bn_gamma, bn_beta)
    out = jax.block_until_ready(out)
    assert out.shape == (N, Cout, Hs, Ws)

    ref = jax.block_until_ready(_reference(x, conv_w, conv_b, bn_gamma, bn_beta))
    max_err = float(jnp.max(jnp.abs(out - ref)))
    assert jnp.allclose(out, ref, atol=1e-3, rtol=1e-3), max_err

    print("KERNEL_OK")
</pallas_src>

<mosaic_0001>
module attributes {stable_mosaic.version = 11 : i64} {
  func.func @_stats_kernel(%arg0: i32, %arg1: i32, %arg2: memref<1x4x256xf32, #tpu.memory_space<vmem>>, %arg3: memref<8x4xf32, #tpu.memory_space<vmem>>, %arg4: memref<8x1xf32, #tpu.memory_space<vmem>>, %arg5: memref<8x1xf32, #tpu.memory_space<vmem>>) attributes {dimension_semantics = [#tpu.dimension_semantics<arbitrary>, #tpu.dimension_semantics<arbitrary>], iteration_bounds = array<i64: 2, 1>, scalar_prefetch = 0 : i64, scratch_operands = 0 : i64, tpu.core_type = #tpu.core_type<tc>, window_params = [{transform_indices = @transform_0, window_bounds = array<i64: 1, 4, 256>}, {pipeline_mode = #tpu.pipeline_mode<synchronous>, transform_indices = @transform_1, window_bounds = array<i64: 8, 4>}, {pipeline_mode = #tpu.pipeline_mode<synchronous>, transform_indices = @transform_2, window_bounds = array<i64: 8, 1>}, {pipeline_mode = #tpu.pipeline_mode<synchronous>, transform_indices = @transform_3, window_bounds = array<i64: 8, 1>}]} {
    %c0_i32 = arith.constant 0 : i32
    %0 = arith.cmpi eq, %arg0, %c0_i32 : i32
    %c0_i32_0 = arith.constant 0 : i32
    %1 = arith.cmpi eq, %arg1, %c0_i32_0 : i32
    %2 = arith.andi %0, %1 : i1
    %3 = arith.extui %2 : i1 to i32
    %c0_i32_1 = arith.constant 0 : i32
    %4 = arith.cmpi ne, %3, %c0_i32_1 : i32
    scf.if %4 {
      %cst_15 = arith.constant 0.000000e+00 : f32
      %42 = vector.broadcast %cst_15 : f32 to vector<8x1xf32>
      %c0_16 = arith.constant 0 : index
      %c0_17 = arith.constant 0 : index
      %43 = vector.load %arg4[%c0_16, %c0_17] : memref<8x1xf32, #tpu.memory_space<vmem>>, vector<8x1xf32>
      tpu.vector_store %arg4[%c0_16, %c0_17], %42 {strides = array<i32>} : memref<8x1xf32, #tpu.memory_space<vmem>>, vector<8x1xf32>,
      %cst_18 = arith.constant 0.000000e+00 : f32
      %44 = vector.broadcast %cst_18 : f32 to vector<8x1xf32>
      %c0_19 = arith.constant 0 : index
      %c0_20 = arith.constant 0 : index
      %45 = vector.load %arg5[%c0_19, %c0_20] : memref<8x1xf32, #tpu.memory_space<vmem>>, vector<8x1xf32>
      tpu.vector_store %arg5[%c0_19, %c0_20], %44 {strides = array<i32>} : memref<8x1xf32, #tpu.memory_space<vmem>>, vector<8x1xf32>,
    } else {
    }
    %c0 = arith.constant 0 : index
    %c0_2 = arith.constant 0 : index
    %c0_3 = arith.constant 0 : index
    %5 = vector.load %arg2[%c0, %c0_2, %c0_3] : memref<1x4x256xf32, #tpu.memory_space<vmem>>, vector<1x4x256xf32>
    %6 = vector.shape_cast %5 : vector<1x4x256xf32> to vector<4x256xf32>
    %c0_4 = arith.constant 0 : index
    %c0_5 = arith.constant 0 : index
    %7 = vector.load %arg3[%c0_4, %c0_5] : memref<8x4xf32, #tpu.memory_space<vmem>>, vector<8x4xf32>
    %8 = vector.extract_strided_slice %7 {offsets = [0, 0], sizes = [8, 1], strides = [1, 1]} : vector<8x4xf32> to vector<8x1xf32>
    %9 = vector.extract_strided_slice %6 {offsets = [0, 0], sizes = [1, 256], strides = [1, 1]} : vector<4x256xf32> to vector<1x256xf32>
    %10 = vector.broadcast %8 : vector<8x1xf32> to vector<8x256xf32>
    %11 = vector.broadcast %9 : vector<1x256xf32> to vector<8x256xf32>
    %12 = arith.mulf %10, %11 : vector<8x256xf32>
    %13 = vector.extract_strided_slice %7 {offsets = [0, 1], sizes = [8, 1], strides = [1, 1]} : vector<8x4xf32> to vector<8x1xf32>
    %14 = vector.extract_strided_slice %6 {offsets = [1, 0], sizes = [1, 256], strides = [1, 1]} : vector<4x256xf32> to vector<1x256xf32>
    %15 = vector.broadcast %13 : vector<8x1xf32> to vector<8x256xf32>
    %16 = vector.broadcast %14 : vector<1x256xf32> to vector<8x256xf32>
    %17 = arith.mulf %15, %16 : vector<8x256xf32>
    %18 = arith.addf %12, %17 : vector<8x256xf32>
    %19 = vector.extract_strided_slice %7 {offsets = [0, 2], sizes = [8, 1], strides = [1, 1]} : vector<8x4xf32> to vector<8x1xf32>
    %20 = vector.extract_strided_slice %6 {offsets = [2, 0], sizes = [1, 256], strides = [1, 1]} : vector<4x256xf32> to vector<1x256xf32>
    %21 = vector.broadcast %19 : vector<8x1xf32> to vector<8x256xf32>
    %22 = vector.broadcast %20 : vector<1x256xf32> to vector<8x256xf32>
    %23 = arith.mulf %21, %22 : vector<8x256xf32>
    %24 = arith.addf %18, %23 : vector<8x256xf32>
    %25 = vector.extract_strided_slice %7 {offsets = [0, 3], sizes = [8, 1], strides = [1, 1]} : vector<8x4xf32> to vector<8x1xf32>
    %26 = vector.extract_strided_slice %6 {offsets = [3, 0], sizes = [1, 256], strides = [1, 1]} : vector<4x256xf32> to vector<1x256xf32>
    %27 = vector.broadcast %25 : vector<8x1xf32> to vector<8x256xf32>
    %28 = vector.broadcast %26 : vector<1x256xf32> to vector<8x256xf32>
    %29 = arith.mulf %27, %28 : vector<8x256xf32>
    %30 = arith.addf %24, %29 : vector<8x256xf32>
    %c0_6 = arith.constant 0 : index
    %c0_7 = arith.constant 0 : index
    %31 = vector.load %arg4[%c0_6, %c0_7] : memref<8x1xf32, #tpu.memory_space<vmem>>, vector<8x1xf32>
    %cst = arith.constant dense<0.000000e+00> : vector<8xf32>
    %32 = vector.multi_reduction <add>, %30, %cst [1] : vector<8x256xf32> to vector<8xf32>
    %33 = vector.shape_cast %32 : vector<8xf32> to vector<8x1xf32>
    %34 = arith.addf %31, %33 : vector<8x1xf32>
    %c0_8 = arith.constant 0 : index
    %c0_9 = arith.constant 0 : index
    %35 = vector.load %arg4[%c0_8, %c0_9] : memref<8x1xf32, #tpu.memory_space<vmem>>, vector<8x1xf32>
    tpu.vector_store %arg4[%c0_8, %c0_9], %34 {strides = array<i32>} : memref<8x1xf32, #tpu.memory_space<vmem>>, vector<8x1xf32>,
    %c0_10 = arith.constant 0 : index
    %c0_11 = arith.constant 0 : index
    %36 = vector.load %arg5[%c0_10, %c0_11] : memref<8x1xf32, #tpu.memory_space<vmem>>, vector<8x1xf32>
    %37 = arith.mulf %30, %30 : vector<8x256xf32>
    %cst_12 = arith.constant dense<0.000000e+00> : vector<8xf32>
    %38 = vector.multi_reduction <add>, %37, %cst_12 [1] : vector<8x256xf32> to vector<8xf32>
    %39 = vector.shape_cast %38 : vector<8xf32> to vector<8x1xf32>
    %40 = arith.addf %36, %39 : vector<8x1xf32>
    %c0_13 = arith.constant 0 : index
    %c0_14 = arith.constant 0 : index
    %41 = vector.load %arg5[%c0_13, %c0_14] : memref<8x1xf32, #tpu.memory_space<vmem>>, vector<8x1xf32>
    tpu.vector_store %arg5[%c0_13, %c0_14], %40 {strides = array<i32>} : memref<8x1xf32, #tpu.memory_space<vmem>>, vector<8x1xf32>,
    return
  }
  func.func @transform_0(%arg0: i32, %arg1: i32) -> (i32, i32, i32) {
    %c0_i32 = arith.constant 0 : i32
    %c0_i32_0 = arith.constant 0 : i32
    return %arg0, %c0_i32, %arg1 : i32, i32, i32
  }
  func.func @transform_1(%arg0: i32, %arg1: i32) -> (i32, i32) {
    %c0_i32 = arith.constant 0 : i32
    %c0_i32_0 = arith.constant 0 : i32
    %c0_i32_1 = arith.constant 0 : i32
    return %c0_i32, %c0_i32_0 : i32, i32
  }
  func.func @transform_2(%arg0: i32, %arg1: i32) -> (i32, i32) {
    %c0_i32 = arith.constant 0 : i32
    %c0_i32_0 = arith.constant 0 : i32
    %c0_i32_1 = arith.constant 0 : i32
    return %c0_i32, %c0_i32_0 : i32, i32
  }
  func.func @transform_3(%arg0: i32, %arg1: i32) -> (i32, i32) {
    %c0_i32 = arith.constant 0 : i32
    %c0_i32_0 = arith.constant 0 : i32
    %c0_i32_1 = arith.constant 0 : i32
    return %c0_i32, %c0_i32_0 : i32, i32
  }
}

module attributes {stable_mosaic.version = 11 : i64} {
  func.func @_normalize_kernel(%arg0: i32, %arg1: i32, %arg2: memref<1x4x256xf32, #tpu.memory_space<vmem>>, %arg3: memref<8x4xf32, #tpu.memory_space<vmem>>, %arg4: memref<8x1xf32, #tpu.memory_space<vmem>>, %arg5: memref<1x8x256xf32, #tpu.memory_space<vmem>>) attributes {dimension_semantics = [#tpu.dimension_semantics<parallel>, #tpu.dimension_semantics<parallel>], iteration_bounds = array<i64: 2, 1>, scalar_prefetch = 0 : i64, scratch_operands = 0 : i64, tpu.core_type = #tpu.core_type<tc>, window_params = [{transform_indices = @transform_0, window_bounds = array<i64: 1, 4, 256>}, {pipeline_mode = #tpu.pipeline_mode<synchronous>, transform_indices = @transform_1, window_bounds = array<i64: 8, 4>}, {pipeline_mode = #tpu.pipeline_mode<synchronous>, transform_indices = @transform_2, window_bounds = array<i64: 8, 1>}, {transform_indices = @transform_3, window_bounds = array<i64: 1, 8, 256>}]} {
    %c0 = arith.constant 0 : index
    %c0_0 = arith.constant 0 : index
    %c0_1 = arith.constant 0 : index
    %0 = vector.load %arg2[%c0, %c0_0, %c0_1] : memref<1x4x256xf32, #tpu.memory_space<vmem>>, vector<1x4x256xf32>
    %1 = vector.shape_cast %0 : vector<1x4x256xf32> to vector<4x256xf32>
    %c0_2 = arith.constant 0 : index
    %c0_3 = arith.constant 0 : index
    %2 = vector.load %arg3[%c0_2, %c0_3] : memref<8x4xf32, #tpu.memory_space<vmem>>, vector<8x4xf32>
    %3 = vector.extract_strided_slice %2 {offsets = [0, 0], sizes = [8, 1], strides = [1, 1]} : vector<8x4xf32> to vector<8x1xf32>
    %4 = vector.extract_strided_slice %1 {offsets = [0, 0], sizes = [1, 256], strides = [1, 1]} : vector<4x256xf32> to vector<1x256xf32>
    %5 = vector.broadcast %3 : vector<8x1xf32> to vector<8x256xf32>
    %6 = vector.broadcast %4 : vector<1x256xf32> to vector<8x256xf32>
    %7 = arith.mulf %5, %6 : vector<8x256xf32>
    %8 = vector.extract_strided_slice %2 {offsets = [0, 1], sizes = [8, 1], strides = [1, 1]} : vector<8x4xf32> to vector<8x1xf32>
    %9 = vector.extract_strided_slice %1 {offsets = [1, 0], sizes = [1, 256], strides = [1, 1]} : vector<4x256xf32> to vector<1x256xf32>
    %10 = vector.broadcast %8 : vector<8x1xf32> to vector<8x256xf32>
    %11 = vector.broadcast %9 : vector<1x256xf32> to vector<8x256xf32>
    %12 = arith.mulf %10, %11 : vector<8x256xf32>
    %13 = arith.addf %7, %12 : vector<8x256xf32>
    %14 = vector.extract_strided_slice %2 {offsets = [0, 2], sizes = [8, 1], strides = [1, 1]} : vector<8x4xf32> to vector<8x1xf32>
    %15 = vector.extract_strided_slice %1 {offsets = [2, 0], sizes = [1, 256], strides = [1, 1]} : vector<4x256xf32> to vector<1x256xf32>
    %16 = vector.broadcast %14 : vector<8x1xf32> to vector<8x256xf32>
    %17 = vector.broadcast %15 : vector<1x256xf32> to vector<8x256xf32>
    %18 = arith.mulf %16, %17 : vector<8x256xf32>
    %19 = arith.addf %13, %18 : vector<8x256xf32>
    %20 = vector.extract_strided_slice %2 {offsets = [0, 3], sizes = [8, 1], strides = [1, 1]} : vector<8x4xf32> to vector<8x1xf32>
    %21 = vector.extract_strided_slice %1 {offsets = [3, 0], sizes = [1, 256], strides = [1, 1]} : vector<4x256xf32> to vector<1x256xf32>
    %22 = vector.broadcast %20 : vector<8x1xf32> to vector<8x256xf32>
    %23 = vector.broadcast %21 : vector<1x256xf32> to vector<8x256xf32>
    %24 = arith.mulf %22, %23 : vector<8x256xf32>
    %25 = arith.addf %19, %24 : vector<8x256xf32>
    %c0_4 = arith.constant 0 : index
    %c0_5 = arith.constant 0 : index
    %26 = vector.load %arg4[%c0_4, %c0_5] : memref<8x1xf32, #tpu.memory_space<vmem>>, vector<8x1xf32>
    %27 = vector.broadcast %26 : vector<8x1xf32> to vector<8x256xf32>
    %28 = arith.addf %25, %27 : vector<8x256xf32>
    %cst = arith.constant 0.000000e+00 : f32
    %29 = vector.broadcast %cst : f32 to vector<8x256xf32>
    %30 = arith.cmpf ogt, %28, %29 : vector<8x256xf32>
    %31 = math.exp %28 : vector<8x256xf32>
    %cst_6 = arith.constant 1.000000e+00 : f32
    %32 = vector.broadcast %cst_6 : f32 to vector<8x256xf32>
    %33 = arith.subf %31, %32 : vector<8x256xf32>
    %34 = arith.select %30, %28, %33 : vector<8x256xi1>, vector<8x256xf32>
    %c0_7 = arith.constant 0 : index
    %c0_8 = arith.constant 0 : index
    %c0_9 = arith.constant 0 : index
    %35 = vector.load %arg5[%c0_7, %c0_8, %c0_9] : memref<1x8x256xf32, #tpu.memory_space<vmem>>, vector<1x8x256xf32>
    %36 = vector.shape_cast %35 : vector<1x8x256xf32> to vector<8x256xf32>
    %37 = vector.shape_cast %34 : vector<8x256xf32> to vector<1x8x256xf32>
    tpu.vector_store %arg5[%c0_7, %c0_8, %c0_9], %37 {strides = array<i32>} : memref<1x8x256xf32, #tpu.memory_space<vmem>>, vector<1x8x256xf32>,
    return
  }
  func.func @transform_0(%arg0: i32, %arg1: i32) -> (i32, i32, i32) {
    %c0_i32 = arith.constant 0 : i32
    %c0_i32_0 = arith.constant 0 : i32
    return %arg0, %c0_i32, %arg1 : i32, i32, i32
  }
  func.func @transform_1(%arg0: i32, %arg1: i32) -> (i32, i32) {
    %c0_i32 = arith.constant 0 : i32
    %c0_i32_0 = arith.constant 0 : i32
    %c0_i32_1 = arith.constant 0 : i32
    return %c0_i32, %c0_i32_0 : i32, i32
  }
  func.func @transform_2(%arg0: i32, %arg1: i32) -> (i32, i32) {
    %c0_i32 = arith.constant 0 : i32
    %c0_i32_0 = arith.constant 0 : i32
    %c0_i32_1 = arith.constant 0 : i32
    return %c0_i32, %c0_i32_0 : i32, i32
  }
  func.func @transform_3(%arg0: i32, %arg1: i32) -> (i32, i32, i32) {
    %c0_i32 = arith.constant 0 : i32
    %c0_i32_0 = arith.constant 0 : i32
    return %arg0, %c0_i32, %arg1 : i32, i32, i32
  }
}

</mosaic_0001>

<llo_original>
// kernel: conv_bn_elu.2
$region0: #{conv_bn_elu.2}
  #allocation0 [shape = 'u32[]', space=smem, size = 0x4, offset = 0x4, fixed_abs, tag = 'smem constant byte address 0x4 - core index']
  #allocation1 [shape = 'u32[72,128]{1,0:T(1,128)}', space=vmem, size = 0x9000, scoped, tag = 'internal scratch']
  %s0 = inlined_call_operand.vmem [shape: f32[2,4,256], index: 0, kind: input, shape index: {}]
  %s1 = inlined_call_operand.vmem [shape: f32[8,4], index: 1, kind: input, shape index: {}]
  %s2 = inlined_call_operand.vmem [shape: f32[8,1], index: 2, kind: output, shape index: {0}]
  %s3 = inlined_call_operand.vmem [shape: f32[8,1], index: 3, kind: output, shape index: {1}]
  %4 = xla_tuple %s2, %s3
  %s5 = sld [smem:[#allocation0]]
  $region53: #{conv_bn_elu.2} parent=0
    _
  %s7 = ssub.s32 1, %s5
  %s8 = scalar_select 0, %s7, %s5
  loop: start=0, step=1, limit=4
  $region2: #{conv_bn_elu.2} parent=0 // loop_pre_header
    _
  $region3: #{conv_bn_elu.2} parent=0 // loop_header
    %s10 = sphi 0, %s14
    %p11 = scmp.ge.s32.totalorder %s10, 4
    %s17 = sphi 0, %s29
    %s18 = sphi 0, %s25
    %s19 = sphi 0, %s17
    %s20 = sphi 0, %s18
    %s21 = sphi 0, %s19
    %s22 = sphi 0, %s20
    %s34 = sphi 0, %s36
    %s37 = sphi 0, %s34
    %s38 = sphi 0, %s37
    %s54 = sphi 0, %s38
    %s58 = sphi 0, %s58
    %s60 = sphi 0, %s58
    %s61 = sphi 0, %s60
    %s75 = sphi 0, %s61
    %s79 = sphi 0, %s79
    %s81 = sphi 0, %s79
    %s82 = sphi 0, %s81
    %s96 = sphi 0, %s82
    %s100 = sphi 0, %s100
    %s102 = sphi 0, %s100
    %s103 = sphi 0, %s102
    %s117 = sphi 0, %s103
  $region4: #{conv_bn_elu.2} parent=0 // loop_header_branch
    %13 = sbr.rel (%p11) target = $region8
  $region5: #{conv_bn_elu.2} parent=0 // loop_body
    %s15 = ssub.s32 %s10, 1
    %s16 = ssub.s32 %s10, 2
    %s23 = sadd.s32 1, %s18
    %p24 = scmp.ge.s32.totalorder %s23, 1
    %s25 = scalar_select %p24, 0, %s23
    %s26 = sadd.s32 1, %s17
    %s27 = scalar_select %p24, %s26, %s17
    %p28 = scmp.ge.s32.totalorder %s27, 2
    %s29 = scalar_select %p28, 0, %s27
    %s30 = ssub.s32 %s17, %s29
    %s31 = ssub.s32 %s18, %s25
    %s32 = sor.u32 %s30, %s31
    %p33 = scmp.eq.s32.totalorder %s32, 0
    %s35 = sadd.s32 %s34, 1
    %s36 = scalar_select %p33, %s34, %s35
    %p39 = pneg %p33
    %p40 = scmp.eq.s32.totalorder %s10, 1
    %p41 = por %p39, %p40
    %p42 = scmp.ne.s32.totalorder %s34, %s37
    %p43 = scmp.eq.s32.totalorder %s10, 0
    %p44 = por %p42, %p43
    %p45 = scmp.ne.s32.totalorder %s34, %s37
    %p46 = scmp.eq.s32.totalorder %s15, 1
    %p47 = por %p45, %p46
    %p48 = scmp.ne.s32.totalorder %s37, %s38
    %p49 = scmp.eq.s32.totalorder %s15, 0
    %p50 = por %p48, %p49
    %p51 = scmp.ne.s32.totalorder %s37, %s38
    %p52 = scmp.eq.s32.totalorder %s16, 1
    %p53 = por %p51, %p52
    %p55 = scmp.ne.s32.totalorder %s38, %s54
    %p56 = scmp.eq.s32.totalorder %s16, 0
    %p57 = por %p55, %p56
    %s59 = sadd.s32 %s58, 1
    %p62 = scmp.eq.s32.totalorder %s10, 1
    %p63 = scmp.ne.s32.totalorder %s58, %s60
    %p64 = scmp.eq.s32.totalorder %s10, 0
    %p65 = por %p63, %p64
    %p66 = scmp.ne.s32.totalorder %s58, %s60
    %p67 = scmp.eq.s32.totalorder %s15, 1
    %p68 = por %p66, %p67
    %p69 = scmp.ne.s32.totalorder %s60, %s61
    %p70 = scmp.eq.s32.totalorder %s15, 0
    %p71 = por %p69, %p70
    %p72 = scmp.ne.s32.totalorder %s60, %s61
    %p73 = scmp.eq.s32.totalorder %s16, 1
    %p74 = por %p72, %p73
    %p76 = scmp.ne.s32.totalorder %s61, %s75
    %p77 = scmp.eq.s32.totalorder %s16, 0
    %p78 = por %p76, %p77
    %s80 = sadd.s32 %s79, 1
    %p83 = scmp.eq.s32.totalorder %s10, 1
    %p84 = scmp.ne.s32.totalorder %s79, %s81
    %p85 = scmp.eq.s32.totalorder %s10, 0
    %p86 = por %p84, %p85
    %p87 = scmp.ne.s32.totalorder %s79, %s81
    %p88 = scmp.eq.s32.totalorder %s15, 1
    %p89 = por %p87, %p88
    %p90 = scmp.ne.s32.totalorder %s81, %s82
    %p91 = scmp.eq.s32.totalorder %s15, 0
    %p92 = por %p90, %p91
    %p93 = scmp.ne.s32.totalorder %s81, %s82
    %p94 = scmp.eq.s32.totalorder %s16, 1
    %p95 = por %p93, %p94
    %p97 = scmp.ne.s32.totalorder %s82, %s96
    %p98 = scmp.eq.s32.totalorder %s16, 0
    %p99 = por %p97, %p98
    %s101 = sadd.s32 %s100, 1
    %p104 = scmp.eq.s32.totalorder %s10, 1
    %p105 = scmp.ne.s32.totalorder %s100, %s102
    %p106 = scmp.eq.s32.totalorder %s10, 0
    %p107 = por %p105, %p106
    %p108 = scmp.ne.s32.totalorder %s100, %s102
    %p109 = scmp.eq.s32.totalorder %s15, 1
    %p110 = por %p108, %p109
    %p111 = scmp.ne.s32.totalorder %s102, %s103
    %p112 = scmp.eq.s32.totalorder %s15, 0
    %p113 = por %p111, %p112
    %p114 = scmp.ne.s32.totalorder %s102, %s103
    %p115 = scmp.eq.s32.totalorder %s16, 1
    %p116 = por %p114, %p115
    %p118 = scmp.ne.s32.totalorder %s103, %s117
    %p119 = scmp.eq.s32.totalorder %s16, 0
    %p120 = por %p118, %p119
    %p121 = scmp.le.s32.totalorder 1, %s10
    %p122 = scmp.lt.s32.totalorder %s10, 3
    %p123 = pnand %p121, %p122
    %p124 = pneg %p123
    // Predicated region
    $region9: #{conv_bn_elu.2} parent=5 // pred_check
      _
    $region10: #{conv_bn_elu.2} parent=5 // pred_check_branch
      %126 = sbr.rel (%p123) target = $region12
    $region11: #{conv_bn_elu.2} parent=5 // pred_region
      %s127 = ssub.s32 %s10, 1
      // Predicated region
      $region13: #{conv_bn_elu.2} parent=11 // pred_check
        %p128 = pneg %p71
      $region14: #{conv_bn_elu.2} parent=11 // pred_check_branch
        %130 = sbr.rel (%p128) target = $region16
      $region15: #{conv_bn_elu.2} parent=11 // pred_region
        _
      $region16: #{conv_bn_elu.2} parent=11 // pred_fallthru
        _
    $region12: #{conv_bn_elu.2} parent=5 // pred_fallthru
      _
    %p131 = scmp.lt.s32.totalorder %s10, 2
    // Predicated region
    $region17: #{conv_bn_elu.2} parent=5 // pred_check
      %p132 = pneg %p131
    $region18: #{conv_bn_elu.2} parent=5 // pred_check_branch
      %134 = sbr.rel (%p132) target = $region20
    $region19: #{conv_bn_elu.2} parent=5 // pred_region
      // Predicated region
      $region21: #{conv_bn_elu.2} parent=19 // pred_check
        %p135 = pneg %p44
      $region22: #{conv_bn_elu.2} parent=19 // pred_check_branch
        %137 = sbr.rel (%p135) target = $region24
      $region23: #{conv_bn_elu.2} parent=19 // pred_region
        %s138 = smul.u32 2, %s18
        %p139 = scmp.lt.s32.totalorder %s17, 1
        %s140 = scalar_select %p139, %s17, 1
        %p141 = scmp.lt.s32.totalorder %s138, 1
        %s142 = scalar_select %p141, %s138, 1
        %s143 = smul.addr %s140, 2
        %s144 = sadd.s32 %s142, %s143
        %s145 = smul.addr %s144, 4
        %s146 = scalar_lea.vmem %s0, %s145
        %s147 = smul.u32 2, %s18
      $region24: #{conv_bn_elu.2} parent=19 // pred_fallthru
        _
    $region20: #{conv_bn_elu.2} parent=5 // pred_fallthru
      _
    %p148 = scmp.le.s32.totalorder 1, %s10
    %p149 = scmp.lt.s32.totalorder %s10, 3
    %p150 = pnand %p148, %p149
    %p151 = pneg %p150
    // Predicated region
    $region25: #{conv_bn_elu.2} parent=5 // pred_check
      _
    $region26: #{conv_bn_elu.2} parent=5 // pred_check_branch
      %153 = sbr.rel (%p150) target = $region28
    $region27: #{conv_bn_elu.2} parent=5 // pred_region
      %s154 = ssub.s32 %s10, 1
      %s155 = smul.u32 2, %s20
      %p156 = scmp.lt.s32.totalorder %s19, 1
      %s157 = scalar_select %p156, %s19, 1
      %p158 = scmp.lt.s32.totalorder %s155, 1
      %s159 = scalar_select %p158, %s155, 1
      %s160 = smul.addr %s157, 2
      %s161 = sadd.s32 %s159, %s160
      %s162 = smul.addr %s161, 4
      %s163 = scalar_lea.vmem %s0, %s162
      %p164 = pneg %p50
      %p165 = pneg %p47
      %p166 = pneg %p71
      %p167 = pneg %p68
      %p168 = pneg %p92
      %p169 = pneg %p89
      %p170 = pneg %p113
      %p171 = pneg %p110
      %s172 = smul.u32 2, %s20
      %p173 = scmp.lt.s32.totalorder %s19, 1
      %s174 = scalar_select %p173, %s19, 1
      %p175 = scmp.lt.s32.totalorder %s172, 1
      %s176 = scalar_select %p175, %s172, 1
      %s177 = smul.addr %s174, 2
      %s178 = sadd.s32 %s176, %s177
      %s179 = smul.addr %s178, 4
      %s180 = scalar_lea.vmem %s0, %s179
      %s181 = smul.u32 2, %s20
      %p182 = scmp.eq.s32.totalorder %s19, 0
      %p183 = scmp.eq.s32.totalorder %s20, 0
      %p184 = pnand %p182, %p183
      %p185 = pneg %p184
      // Predicated region
      $region29: #{conv_bn_elu.2} parent=27 // pred_check
        _
      $region30: #{conv_bn_elu.2} parent=27 // pred_check_branch
        %187 = sbr.rel (%p184) target = $region32
      $region31: #{conv_bn_elu.2} parent=27 // pred_region
        %vm188 = vcmask 7168
        %189 = vst.msk [vmem:[%s2] sm:$0xff] %vm188, 0.0
        %190 = vst.msk [vmem:[%s3] sm:$0xff] %vm188, 0.0
      $region32: #{conv_bn_elu.2} parent=27 // pred_fallthru
        _
      %v191 = vld [vmem:[%s180] sm:$0xff]
      %v192 = vld [vmem:[%s1] sm:$0xff]
      %194 = vset.pattern.permute.xlu0 0
      %195 = vperm.xlu0 %194, %v192
      %v196 = vpop.permute.xlu0 %195
      %v199 = vperm.slane %v191, 0
      %v200 = vperm.slane %v191, 4
      %v203 = vperm.slane %v199, 0
      %v204 = vperm.slane %v200, 0
      %v205 = vmul.f32 %v196, %v203
      %v206 = vmul.f32 %v196, %v204
      %207 = vset.pattern.permute.xlu0 1
      %208 = vperm.xlu0 %207, %v192
      %v209 = vpop.permute.xlu0 %208
      %v211 = vperm.slane %v191, 1
      %v212 = vperm.slane %v191, 5
      %v215 = vperm.slane %v211, 1
      %v216 = vperm.slane %v212, 1
      %v217 = vmul.f32 %v209, %v215
      %v218 = vmul.f32 %v209, %v216
      %v219 = vadd.f32 %v205, %v217
      %v220 = vadd.f32 %v206, %v218
      %221 = vset.pattern.permute.xlu0 2
      %222 = vperm.xlu0 %221, %v192
      %v223 = vpop.permute.xlu0 %222
      %v225 = vperm.slane %v191, 2
      %v226 = vperm.slane %v191, 6
      %v229 = vperm.slane %v225, 2
      %v230 = vperm.slane %v226, 2
      %v231 = vmul.f32 %v223, %v229
      %v232 = vmul.f32 %v223, %v230
      %v233 = vadd.f32 %v219, %v231
      %v234 = vadd.f32 %v220, %v232
      %235 = vset.pattern.permute.xlu0 3
      %236 = vperm.xlu0 %235, %v192
      %v237 = vpop.permute.xlu0 %236
      %v239 = vperm.slane %v191, 3
      %v240 = vperm.slane %v191, 7
      %v243 = vperm.slane %v239, 3
      %v244 = vperm.slane %v240, 3
      %v245 = vmul.f32 %v237, %v243
      %v246 = vmul.f32 %v237, %v244
      %v247 = vadd.f32 %v233, %v245
      %v248 = vadd.f32 %v234, %v246
      %v249 = vld [vmem:[%s2] sm:$0xff]
      %v250 = vadd.f32 %v247, %v248
      %251 = vadd.xlane.f32.xlu0 %v250
      %v252 = vpop.xlane.xlu0 %251
      %v253 = vadd.f32 %v249, %v252
      %vm254 = vcmask 7168
      %255 = vst.msk [vmem:[%s2] sm:$0xff] %vm254, %v253
      %v256 = vld [vmem:[%s3] sm:$0xff]
      %v257 = vmul.f32 %v247, %v247
      %v258 = vmul.f32 %v248, %v248
      %v259 = vadd.f32 %v257, %v258
      %260 = vadd.xlane.f32.xlu0 %v259
      %v261 = vpop.xlane.xlu0 %260
      %v262 = vadd.f32 %v256, %v261
      %263 = vst.msk [vmem:[%s3] sm:$0xff] %vm254, %v262
      // Predicated region
      $region33: #{conv_bn_elu.2} parent=27 // pred_check
        %p264 = pneg %p89
      $region34: #{conv_bn_elu.2} parent=27 // pred_check_branch
        %266 = sbr.rel (%p264) target = $region36
      $region35: #{conv_bn_elu.2} parent=27 // pred_region
        _
      $region36: #{conv_bn_elu.2} parent=27 // pred_fallthru
        _
      // Predicated region
      $region37: #{conv_bn_elu.2} parent=27 // pred_check
        %p267 = pneg %p110
      $region38: #{conv_bn_elu.2} parent=27 // pred_check_branch
        %269 = sbr.rel (%p267) target = $region40
      $region39: #{conv_bn_elu.2} parent=27 // pred_region
        _
      $region40: #{conv_bn_elu.2} parent=27 // pred_fallthru
        _
      // Predicated region
      $region41: #{conv_bn_elu.2} parent=27 // pred_check
        %p270 = pneg %p89
      $region42: #{conv_bn_elu.2} parent=27 // pred_check_branch
        %272 = sbr.rel (%p270) target = $region44
      $region43: #{conv_bn_elu.2} parent=27 // pred_region
        _
      $region44: #{conv_bn_elu.2} parent=27 // pred_fallthru
        _
      // Predicated region
      $region45: #{conv_bn_elu.2} parent=27 // pred_check
        %p273 = pneg %p110
      $region46: #{conv_bn_elu.2} parent=27 // pred_check_branch
        %275 = sbr.rel (%p273) target = $region48
      $region47: #{conv_bn_elu.2} parent=27 // pred_region
        _
      $region48: #{conv_bn_elu.2} parent=27 // pred_fallthru
        _
    $region28: #{conv_bn_elu.2} parent=5 // pred_fallthru
      _
    %p276 = scmp.le.s32.totalorder 2, %s10
    // Predicated region
    $region49: #{conv_bn_elu.2} parent=5 // pred_check
      %p277 = pneg %p276
    $region50: #{conv_bn_elu.2} parent=5 // pred_check_branch
      %279 = sbr.rel (%p277) target = $region52
    $region51: #{conv_bn_elu.2} parent=5 // pred_region
      %s280 = ssub.s32 %s10, 2
    $region52: #{conv_bn_elu.2} parent=5 // pred_fallthru
      _
  $region6: #{conv_bn_elu.2} parent=0 // loop_footer
    %s14 = sadd.s32 1, %s10
  $region7: #{conv_bn_elu.2} parent=0 // loop_footer_branch
    %9 = sbr.rel target = $region3
  $region8: #{conv_bn_elu.2} parent=0 // loop_exit
    _

// kernel: conv_bn_elu.3
$region0: #{conv_bn_elu.3}
  #allocation0 [shape = 'u32[]', space=smem, size = 0x4, offset = 0x4, fixed_abs, tag = 'smem constant byte address 0x4 - core index']
  #allocation1 [shape = 'u32[72,128]{1,0:T(1,128)}', space=vmem, size = 0x9000, scoped, tag = 'internal scratch']
  %s0 = inlined_call_operand.vmem [shape: f32[2,4,256], index: 0, kind: input, shape index: {}]
  %s1 = inlined_call_operand.vmem [shape: f32[8,4], index: 1, kind: input, shape index: {}]
  %s2 = inlined_call_operand.vmem [shape: f32[8,1], index: 2, kind: input, shape index: {}]
  %s3 = inlined_call_operand.vmem [shape: f32[2,8,256], index: 3, kind: output, shape index: {}]
  %s4 = sld [smem:[#allocation0]]
  $region45: #{conv_bn_elu.3} parent=0
    _
  %s6 = ssub.s32 1, %s4
  %s7 = scalar_select 0, %s6, %s4
  loop: start=0, step=1, limit=4
  $region2: #{conv_bn_elu.3} parent=0 // loop_pre_header
    _
  $region3: #{conv_bn_elu.3} parent=0 // loop_header
    %s9 = sphi 0, %s13
    %p10 = scmp.ge.s32.totalorder %s9, 4
    %s16 = sphi 0, %s28
    %s17 = sphi 0, %s24
    %s18 = sphi 0, %s16
    %s19 = sphi 0, %s17
    %s20 = sphi 0, %s18
    %s21 = sphi 0, %s19
    %s33 = sphi 0, %s35
    %s36 = sphi 0, %s33
    %s37 = sphi 0, %s36
    %s53 = sphi 0, %s37
    %s57 = sphi 0, %s57
    %s59 = sphi 0, %s57
    %s60 = sphi 0, %s59
    %s74 = sphi 0, %s60
    %s78 = sphi 0, %s78
    %s80 = sphi 0, %s78
    %s81 = sphi 0, %s80
    %s95 = sphi 0, %s81
    %s103 = sphi 0, %s105
    %s106 = sphi 0, %s103
    %s107 = sphi 0, %s106
    %s123 = sphi 0, %s107
  $region4: #{conv_bn_elu.3} parent=0 // loop_header_branch
    %12 = sbr.rel (%p10) target = $region8
  $region5: #{conv_bn_elu.3} parent=0 // loop_body
    %s14 = ssub.s32 %s9, 1
    %s15 = ssub.s32 %s9, 2
    %s22 = sadd.s32 1, %s17
    %p23 = scmp.ge.s32.totalorder %s22, 1
    %s24 = scalar_select %p23, 0, %s22
    %s25 = sadd.s32 1, %s16
    %s26 = scalar_select %p23, %s25, %s16
    %p27 = scmp.ge.s32.totalorder %s26, 2
    %s28 = scalar_select %p27, 0, %s26
    %s29 = ssub.s32 %s16, %s28
    %s30 = ssub.s32 %s17, %s24
    %s31 = sor.u32 %s29, %s30
    %p32 = scmp.eq.s32.totalorder %s31, 0
    %s34 = sadd.s32 %s33, 1
    %s35 = scalar_select %p32, %s33, %s34
    %p38 = pneg %p32
    %p39 = scmp.eq.s32.totalorder %s9, 1
    %p40 = por %p38, %p39
    %p41 = scmp.ne.s32.totalorder %s33, %s36
    %p42 = scmp.eq.s32.totalorder %s9, 0
    %p43 = por %p41, %p42
    %p44 = scmp.ne.s32.totalorder %s33, %s36
    %p45 = scmp.eq.s32.totalorder %s14, 1
    %p46 = por %p44, %p45
    %p47 = scmp.ne.s32.totalorder %s36, %s37
    %p48 = scmp.eq.s32.totalorder %s14, 0
    %p49 = por %p47, %p48
    %p50 = scmp.ne.s32.totalorder %s36, %s37
    %p51 = scmp.eq.s32.totalorder %s15, 1
    %p52 = por %p50, %p51
    %p54 = scmp.ne.s32.totalorder %s37, %s53
    %p55 = scmp.eq.s32.totalorder %s15, 0
    %p56 = por %p54, %p55
    %s58 = sadd.s32 %s57, 1
    %p61 = scmp.eq.s32.totalorder %s9, 1
    %p62 = scmp.ne.s32.totalorder %s57, %s59
    %p63 = scmp.eq.s32.totalorder %s9, 0
    %p64 = por %p62, %p63
    %p65 = scmp.ne.s32.totalorder %s57, %s59
    %p66 = scmp.eq.s32.totalorder %s14, 1
    %p67 = por %p65, %p66
    %p68 = scmp.ne.s32.totalorder %s59, %s60
    %p69 = scmp.eq.s32.totalorder %s14, 0
    %p70 = por %p68, %p69
    %p71 = scmp.ne.s32.totalorder %s59, %s60
    %p72 = scmp.eq.s32.totalorder %s15, 1
    %p73 = por %p71, %p72
    %p75 = scmp.ne.s32.totalorder %s60, %s74
    %p76 = scmp.eq.s32.totalorder %s15, 0
    %p77 = por %p75, %p76
    %s79 = sadd.s32 %s78, 1
    %p82 = scmp.eq.s32.totalorder %s9, 1
    %p83 = scmp.ne.s32.totalorder %s78, %s80
    %p84 = scmp.eq.s32.totalorder %s9, 0
    %p85 = por %p83, %p84
    %p86 = scmp.ne.s32.totalorder %s78, %s80
    %p87 = scmp.eq.s32.totalorder %s14, 1
    %p88 = por %p86, %p87
    %p89 = scmp.ne.s32.totalorder %s80, %s81
    %p90 = scmp.eq.s32.totalorder %s14, 0
    %p91 = por %p89, %p90
    %p92 = scmp.ne.s32.totalorder %s80, %s81
    %p93 = scmp.eq.s32.totalorder %s15, 1
    %p94 = por %p92, %p93
    %p96 = scmp.ne.s32.totalorder %s81, %s95
    %p97 = scmp.eq.s32.totalorder %s15, 0
    %p98 = por %p96, %p97
    %s99 = ssub.s32 %s16, %s28
    %s100 = ssub.s32 %s17, %s24
    %s101 = sor.u32 %s99, %s100
    %p102 = scmp.eq.s32.totalorder %s101, 0
    %s104 = sadd.s32 %s103, 1
    %s105 = scalar_select %p102, %s103, %s104
    %p108 = pneg %p102
    %p109 = scmp.eq.s32.totalorder %s9, 1
    %p110 = por %p108, %p109
    %p111 = scmp.ne.s32.totalorder %s103, %s106
    %p112 = scmp.eq.s32.totalorder %s9, 0
    %p113 = por %p111, %p112
    %p114 = scmp.ne.s32.totalorder %s103, %s106
    %p115 = scmp.eq.s32.totalorder %s14, 1
    %p116 = por %p114, %p115
    %p117 = scmp.ne.s32.totalorder %s106, %s107
    %p118 = scmp.eq.s32.totalorder %s14, 0
    %p119 = por %p117, %p118
    %p120 = scmp.ne.s32.totalorder %s106, %s107
    %p121 = scmp.eq.s32.totalorder %s15, 1
    %p122 = por %p120, %p121
    %p124 = scmp.ne.s32.totalorder %s107, %s123
    %p125 = scmp.eq.s32.totalorder %s15, 0
    %p126 = por %p124, %p125
    %p127 = scmp.le.s32.totalorder 1, %s9
    %p128 = scmp.lt.s32.totalorder %s9, 3
    %p129 = pnand %p127, %p128
    %p130 = pneg %p129
    // Predicated region
    $region9: #{conv_bn_elu.3} parent=5 // pred_check
      _
    $region10: #{conv_bn_elu.3} parent=5 // pred_check_branch
      %132 = sbr.rel (%p129) target = $region12
    $region11: #{conv_bn_elu.3} parent=5 // pred_region
      %s133 = ssub.s32 %s9, 1
      // Predicated region
      $region13: #{conv_bn_elu.3} parent=11 // pred_check
        %p134 = pneg %p70
      $region14: #{conv_bn_elu.3} parent=11 // pred_check_branch
        %136 = sbr.rel (%p134) target = $region16
      $region15: #{conv_bn_elu.3} parent=11 // pred_region
        _
      $region16: #{conv_bn_elu.3} parent=11 // pred_fallthru
        _
      // Predicated region
      $region17: #{conv_bn_elu.3} parent=11 // pred_check
        %p137 = pneg %p91
      $region18: #{conv_bn_elu.3} parent=11 // pred_check_branch
        %139 = sbr.rel (%p137) target = $region20
      $region19: #{conv_bn_elu.3} parent=11 // pred_region
        _
      $region20: #{conv_bn_elu.3} parent=11 // pred_fallthru
        _
    $region12: #{conv_bn_elu.3} parent=5 // pred_fallthru
      _
    %p140 = scmp.lt.s32.totalorder %s9, 2
    // Predicated region
    $region21: #{conv_bn_elu.3} parent=5 // pred_check
      %p141 = pneg %p140
    $region22: #{conv_bn_elu.3} parent=5 // pred_check_branch
      %143 = sbr.rel (%p141) target = $region24
    $region23: #{conv_bn_elu.3} parent=5 // pred_region
      // Predicated region
      $region25: #{conv_bn_elu.3} parent=23 // pred_check
        %p144 = pneg %p43
      $region26: #{conv_bn_elu.3} parent=23 // pred_check_branch
        %146 = sbr.rel (%p144) target = $region28
      $region27: #{conv_bn_elu.3} parent=23 // pred_region
        %s147 = smul.u32 2, %s17
        %p148 = scmp.lt.s32.totalorder %s16, 1
        %s149 = scalar_select %p148, %s16, 1
        %p150 = scmp.lt.s32.totalorder %s147, 1
        %s151 = scalar_select %p150, %s147, 1
        %s152 = smul.addr %s149, 2
        %s153 = sadd.s32 %s151, %s152
        %s154 = smul.addr %s153, 4
        %s155 = scalar_lea.vmem %s0, %s154
        %s156 = smul.u32 2, %s17
      $region28: #{conv_bn_elu.3} parent=23 // pred_fallthru
        _
    $region24: #{conv_bn_elu.3} parent=5 // pred_fallthru
      _
    %p157 = scmp.le.s32.totalorder 1, %s9
    %p158 = scmp.lt.s32.totalorder %s9, 3
    %p159 = pnand %p157, %p158
    %p160 = pneg %p159
    // Predicated region
    $region29: #{conv_bn_elu.3} parent=5 // pred_check
      _
    $region30: #{conv_bn_elu.3} parent=5 // pred_check_branch
      %162 = sbr.rel (%p159) target = $region32
    $region31: #{conv_bn_elu.3} parent=5 // pred_region
      %s163 = ssub.s32 %s9, 1
      %s164 = smul.u32 2, %s19
      %p165 = scmp.lt.s32.totalorder %s18, 1
      %s166 = scalar_select %p165, %s18, 1
      %p167 = scmp.lt.s32.totalorder %s164, 1
      %s168 = scalar_select %p167, %s164, 1
      %s169 = smul.addr %s166, 2
      %s170 = sadd.s32 %s168, %s169
      %s171 = smul.addr %s170, 4
      %s172 = scalar_lea.vmem %s0, %s171
      %p173 = pneg %p49
      %p174 = pneg %p46
      %p175 = pneg %p70
      %p176 = pneg %p67
      %p177 = pneg %p91
      %p178 = pneg %p88
      %p179 = pneg %p119
      %p180 = pneg %p116
      %s181 = smul.u32 2, %s19
      %p182 = scmp.lt.s32.totalorder %s18, 1
      %s183 = scalar_select %p182, %s18, 1
      %p184 = scmp.lt.s32.totalorder %s181, 1
      %s185 = scalar_select %p184, %s181, 1
      %s186 = smul.addr %s183, 2
      %s187 = sadd.s32 %s185, %s186
      %s188 = smul.addr %s187, 8
      %s189 = scalar_lea.vmem %s3, %s188
      %s190 = smul.u32 2, %s19
      %p191 = scmp.lt.s32.totalorder %s18, 1
      %s192 = scalar_select %p191, %s18, 1
      %p193 = scmp.lt.s32.totalorder %s190, 1
      %s194 = scalar_select %p193, %s190, 1
      %s195 = smul.addr %s192, 2
      %s196 = sadd.s32 %s194, %s195
      %s197 = smul.addr %s196, 4
      %s198 = scalar_lea.vmem %s0, %s197
      %s199 = smul.u32 2, %s19
      %s200 = smul.u32 2, %s19
      %p201 = scmp.lt.s32.totalorder %s18, 1
      %s202 = scalar_select %p201, %s18, 1
      %p203 = scmp.lt.s32.totalorder %s200, 1
      %s204 = scalar_select %p203, %s200, 1
      %s205 = smul.addr %s202, 2
      %s206 = sadd.s32 %s204, %s205
      %s207 = smul.addr %s206, 8
      %s208 = scalar_lea.vmem %s3, %s207
      %s209 = smul.u32 2, %s19
      %v210 = vld [vmem:[%s198] sm:$0xff]
      %v211 = vld [vmem:[%s1] sm:$0xff]
      %213 = vset.pattern.permute.xlu0 0
      %214 = vperm.xlu0 %213, %v211
      %v215 = vpop.permute.xlu0 %214
      %v218 = vperm.slane %v210, 0
      %v219 = vperm.slane %v210, 4
      %v222 = vperm.slane %v218, 0
      %v223 = vperm.slane %v219, 0
      %v224 = vmul.f32 %v215, %v222
      %v225 = vmul.f32 %v215, %v223
      %226 = vset.pattern.permute.xlu0 1
      %227 = vperm.xlu0 %226, %v211
      %v228 = vpop.permute.xlu0 %227
      %v230 = vperm.slane %v210, 1
      %v231 = vperm.slane %v210, 5
      %v234 = vperm.slane %v230, 1
      %v235 = vperm.slane %v231, 1
      %v236 = vmul.f32 %v228, %v234
      %v237 = vmul.f32 %v228, %v235
      %v238 = vadd.f32 %v224, %v236
      %v239 = vadd.f32 %v225, %v237
      %240 = vset.pattern.permute.xlu0 2
      %241 = vperm.xlu0 %240, %v211
      %v242 = vpop.permute.xlu0 %241
      %v244 = vperm.slane %v210, 2
      %v245 = vperm.slane %v210, 6
      %v248 = vperm.slane %v244, 2
      %v249 = vperm.slane %v245, 2
      %v250 = vmul.f32 %v242, %v248
      %v251 = vmul.f32 %v242, %v249
      %v252 = vadd.f32 %v238, %v250
      %v253 = vadd.f32 %v239, %v251
      %254 = vset.pattern.permute.xlu0 3
      %255 = vperm.xlu0 %254, %v211
      %v256 = vpop.permute.xlu0 %255
      %v258 = vperm.slane %v210, 3
      %v259 = vperm.slane %v210, 7
      %v262 = vperm.slane %v258, 3
      %v263 = vperm.slane %v259, 3
      %v264 = vmul.f32 %v256, %v262
      %v265 = vmul.f32 %v256, %v263
      %v266 = vadd.f32 %v252, %v264
      %v267 = vadd.f32 %v253, %v265
      %v268 = vld [vmem:[%s2] sm:$0xff]
      %270 = vset.pattern.permute.xlu0 0
      %271 = vperm.xlu0 %270, %v268
      %v272 = vpop.permute.xlu0 %271
      %v274 = vadd.f32 %v266, %v272
      %v275 = vadd.f32 %v267, %v272
      %vm276 = vcmp.gt.f32.partialorder %v274, 0.0
      %vm277 = vcmp.gt.f32.partialorder %v275, 0.0
      %v278 = vmul.f32 %v274, 1.442695
      %v279 = vpow.pop %v278
      %v280 = vmul.f32 %v275, 1.442695
      %v281 = vpow.pop %v280
      %v282 = vsub.f32 %v279, 1.0
      %v283 = vsub.f32 %v281, 1.0
      %v284 = vsel %vm276, %v274, %v282
      %v285 = vsel %vm277, %v275, %v283
      %286 = vst [vmem:[%s208] sm:$0xff] %v284
      %287 = vst [vmem:[%s208 + $0x8] sm:$0xff] %v285
      %s288 = smul.u32 2, %s19
      %p289 = scmp.lt.s32.totalorder %s18, 1
      %s290 = scalar_select %p289, %s18, 1
      %p291 = scmp.lt.s32.totalorder %s288, 1
      %s292 = scalar_select %p291, %s288, 1
      %s293 = smul.addr %s290, 2
      %s294 = sadd.s32 %s292, %s293
      %s295 = smul.addr %s294, 8
      %s296 = scalar_lea.vmem %s3, %s295
      // Predicated region
      $region33: #{conv_bn_elu.3} parent=31 // pred_check
        %p297 = pneg %p116
      $region34: #{conv_bn_elu.3} parent=31 // pred_check_branch
        %299 = sbr.rel (%p297) target = $region36
      $region35: #{conv_bn_elu.3} parent=31 // pred_region
        %s300 = smul.u32 2, %s19
      $region36: #{conv_bn_elu.3} parent=31 // pred_fallthru
        _
    $region32: #{conv_bn_elu.3} parent=5 // pred_fallthru
      _
    %p301 = scmp.le.s32.totalorder 2, %s9
    // Predicated region
    $region37: #{conv_bn_elu.3} parent=5 // pred_check
      %p302 = pneg %p301
    $region38: #{conv_bn_elu.3} parent=5 // pred_check_branch
      %304 = sbr.rel (%p302) target = $region40
    $region39: #{conv_bn_elu.3} parent=5 // pred_region
      %s305 = ssub.s32 %s9, 2
      // Predicated region
      $region41: #{conv_bn_elu.3} parent=39 // pred_check
        %p306 = pneg %p122
      $region42: #{conv_bn_elu.3} parent=39 // pred_check_branch
        %308 = sbr.rel (%p306) target = $region44
      $region43: #{conv_bn_elu.3} parent=39 // pred_region
        %s309 = smul.u32 2, %s21
        %p310 = scmp.lt.s32.totalorder %s20, 1
        %s311 = scalar_select %p310, %s20, 1
        %p312 = scmp.lt.s32.totalorder %s309, 1
        %s313 = scalar_select %p312, %s309, 1
        %s314 = smul.addr %s311, 2
        %s315 = sadd.s32 %s313, %s314
        %s316 = smul.addr %s315, 8
        %s317 = scalar_lea.vmem %s3, %s316
      $region44: #{conv_bn_elu.3} parent=39 // pred_fallthru
        _
    $region40: #{conv_bn_elu.3} parent=5 // pred_fallthru
      _
  $region6: #{conv_bn_elu.3} parent=0 // loop_footer
    %s13 = sadd.s32 1, %s9
  $region7: #{conv_bn_elu.3} parent=0 // loop_footer_branch
    %8 = sbr.rel target = $region3
  $region8: #{conv_bn_elu.3} parent=0 // loop_exit
    _

</llo_original>
